<compile_context>
chip_gen: v6e
topology: v6e:2x2x1
jax: 0.10.0
libtpu: 0.0.40
codegen_flags: <defaults>
</compile_context>

<pallas_src>
import functools

import jax
import jax.numpy as jnp
from jax import lax
from jax.experimental import pallas as pl
from jax.experimental.pallas import tpu as pltpu


def _round_up(x, m):
    return (x + m - 1) // m * m


# ----------------------------------------------------------------------------
# Activations (applied inside kernels, kept in f32)
# ----------------------------------------------------------------------------
def _act_none(x):
    return x


def _act_relu(x):
    return jnp.maximum(x, 0.0)


def _act_gelu(x):
    # TODO(synk): PyTorch nn.GELU uses exact erf; tanh approximation kept here
    # for a guaranteed-safe Mosaic lowering of the elementwise epilogue.
    c = jnp.float32(0.7978845608028654)
    return 0.5 * x * (1.0 + jnp.tanh(c * (x + 0.044715 * x * x * x)))


ACTS = {"none": _act_none, "relu": _act_relu, "gelu": _act_gelu}


# ----------------------------------------------------------------------------
# Kernel 1: tiled fused matmul  out = act(x @ w * scale + shift)
#   bf16 operands, f32 accumulation directly in the resident output block.
# ----------------------------------------------------------------------------
def _mm_kernel(act_fn, x_ref, w_ref, s_ref, b_ref, o_ref):
    k = pl.program_id(2)

    @pl.when(k == 0)
    def _():
        o_ref[...] = jnp.zeros_like(o_ref)

    o_ref[...] += jnp.dot(x_ref[...], w_ref[...],
                          preferred_element_type=jnp.float32)

    @pl.when(k == pl.num_programs(2) - 1)
    def _():
        o_ref[...] = act_fn(o_ref[...] * s_ref[...] + b_ref[...])


def matmul_fused(x, w, scale=None, shift=None, act="none"):
    """act(x @ w * scale + shift).  x: (M, K), w: (K, N), scale/shift: (N,)."""
    M, K = x.shape
    K2, N = w.shape
    assert K == K2
    x = x.astype(jnp.bfloat16)
    w = w.astype(jnp.bfloat16)
    scale = (jnp.ones((N,), jnp.float32) if scale is None
             else scale.astype(jnp.float32))
    shift = (jnp.zeros((N,), jnp.float32) if shift is None
             else shift.astype(jnp.float32))

    # Row (M) tiling: single block for the small-M shapes in this model.
    Mp = _round_up(M, 8)
    if Mp <= 512:
        tm = Mp
    else:
        tm = 256
        Mp = _round_up(M, tm)
    # Lane (N) tiling: fat lane-dense tiles; N=1024 keeps 2 parallel blocks
    # so v7x's two TensorCores can split the grid.
    Np = _round_up(N, 128)
    if Np <= 512:
        tn = Np
    elif Np % 512 == 0:
        tn = 512
    elif Np % 256 == 0:
        tn = 256
    else:
        tn = 128
    # K tiling: one fat block (all K in this model are <= 768).
    Kp = _round_up(K, 128)
    if Kp <= 2048:
        tk = Kp
    else:
        tk = 1024
        Kp = _round_up(K, tk)

    # Pad only when needed (most shapes here are already 8/128 aligned).
    xp = x if (M == Mp and K == Kp) else (
        jnp.zeros((Mp, Kp), jnp.bfloat16).at[:M, :K].set(x))
    wp = w if (K == Kp and N == Np) else (
        jnp.zeros((Kp, Np), jnp.bfloat16).at[:K, :N].set(w))
    sp = scale.reshape(1, N) if N == Np else (
        jnp.zeros((1, Np), jnp.float32).at[0, :N].set(scale))
    bp = shift.reshape(1, N) if N == Np else (
        jnp.zeros((1, Np), jnp.float32).at[0, :N].set(shift))

    grid = (Mp // tm, Np // tn, Kp // tk)
    out = pl.pallas_call(
        functools.partial(_mm_kernel, ACTS[act]),
        out_shape=jax.ShapeDtypeStruct((Mp, Np), jnp.float32),
        grid_spec=pltpu.PrefetchScalarGridSpec(
            num_scalar_prefetch=0,
            grid=grid,
            in_specs=[
                pl.BlockSpec((tm, tk), lambda i, j, k: (i, k)),
                pl.BlockSpec((tk, tn), lambda i, j, k: (k, j)),
                pl.BlockSpec((1, tn), lambda i, j, k: (0, j)),
                pl.BlockSpec((1, tn), lambda i, j, k: (0, j)),
            ],
            out_specs=pl.BlockSpec((tm, tn), lambda i, j, k: (i, j)),
        ),
        compiler_params=pltpu.CompilerParams(
            dimension_semantics=("parallel", "parallel", "arbitrary")),
    )(xp, wp, sp, bp)
    if Mp != M or Np != N:
        out = out[:M, :N]
    return out


# ----------------------------------------------------------------------------
# Kernel 2: batched single-head cross attention (fits in VMEM, grid over B)
# ----------------------------------------------------------------------------
def _attn_kernel(scale, nk_valid, q_ref, k_ref, v_ref, o_ref):
    q = q_ref[0].astype(jnp.bfloat16)
    k = k_ref[0].astype(jnp.bfloat16)
    v = v_ref[0].astype(jnp.bfloat16)
    s = lax.dot_general(q, k, (((1,), (1,)), ((), ())),
                        preferred_element_type=jnp.float32) * scale
    col = lax.broadcasted_iota(jnp.int32, s.shape, 1)
    s = jnp.where(col < nk_valid, s, -1e30)
    s = s - jnp.max(s, axis=-1, keepdims=True)
    p = jnp.exp(s)
    p = p * pl.reciprocal(jnp.sum(p, axis=-1, keepdims=True), approx=True)
    o_ref[0] = jnp.dot(p.astype(jnp.bfloat16), v,
                       preferred_element_type=jnp.float32)


def attention(q, k, v):
    """q: (B, Nq, C), k/v: (B, Nk, C) -> (B, Nq, C)."""
    B, Nq, C = q.shape
    Nk = k.shape[1]
    Nqp = _round_up(Nq, 8)
    Nkp = _round_up(Nk, 8)
    if Nqp != Nq:
        q = jnp.pad(q, ((0, 0), (0, Nqp - Nq), (0, 0)))
    if Nkp != Nk:
        k = jnp.pad(k, ((0, 0), (0, Nkp - Nk), (0, 0)))
        v = jnp.pad(v, ((0, 0), (0, Nkp - Nk), (0, 0)))
    out = pl.pallas_call(
        functools.partial(_attn_kernel, float(C) ** -0.5, Nk),
        grid=(B,),
        in_specs=[
            pl.BlockSpec((1, Nqp, C), lambda b: (b, 0, 0)),
            pl.BlockSpec((1, Nkp, C), lambda b: (b, 0, 0)),
            pl.BlockSpec((1, Nkp, C), lambda b: (b, 0, 0)),
        ],
        out_specs=pl.BlockSpec((1, Nqp, C), lambda b: (b, 0, 0)),
        out_shape=jax.ShapeDtypeStruct((B, Nqp, C), jnp.float32),
        compiler_params=pltpu.CompilerParams(
            dimension_semantics=("parallel",)),
    )(q, k, v)
    return out[:, :Nq]


# ----------------------------------------------------------------------------
# Kernel 3: fully fused SE block (pool + fc1/ReLU + fc2 + gated residual)
# ----------------------------------------------------------------------------
def _se_kernel(x_ref, w1_ref, b1_ref, w2_ref, b2_ref, o_ref):
    x = x_ref[0]                                     # (HW, C) f32
    avg = jnp.mean(x, axis=0, keepdims=True)
    mx = jnp.max(x, axis=0, keepdims=True)
    pooled = jnp.concatenate([avg, mx], axis=0)      # (2, C): [avg; max]
    h = jnp.dot(pooled.astype(jnp.bfloat16), w1_ref[...],
                preferred_element_type=jnp.float32) + b1_ref[...]
    h = jnp.maximum(h, 0.0)
    g = jnp.dot(h.astype(jnp.bfloat16), w2_ref[...],
                preferred_element_type=jnp.float32) + b2_ref[...]
    gate = g[0:1, :] + g[1:2, :]                     # fc(avg) + fc(max)
    o_ref[0] = x * (1.0 + jax.nn.sigmoid(gate))      # x*sigmoid(gate) + x


def senet_fwd(x, p):
    """x: (N, H, W, C) NHWC -> same; one fused Pallas kernel per image."""
    N, H, W, C = x.shape
    HW = H * W
    cr = p["fc1_w"].shape[1]
    crp = max(128, _round_up(cr, 128))               # zero-pad hidden dim (exact)
    w1p = jnp.zeros((C, crp), jnp.bfloat16).at[:, :cr].set(
        p["fc1_w"].astype(jnp.bfloat16))
    b1p = jnp.zeros((1, crp), jnp.float32).at[0, :cr].set(
        p["fc1_b"].astype(jnp.float32))
    w2p = jnp.zeros((crp, C), jnp.bfloat16).at[:cr, :].set(
        p["fc2_w"].astype(jnp.bfloat16))
    b2p = p["fc2_b"].astype(jnp.float32).reshape(1, C)
    x2 = x.reshape(N, HW, C)
    out = pl.pallas_call(
        _se_kernel,
        grid=(N,),
        in_specs=[
            pl.BlockSpec((1, HW, C), lambda n: (n, 0, 0)),
            pl.BlockSpec((C, crp), lambda n: (0, 0)),
            pl.BlockSpec((1, crp), lambda n: (0, 0)),
            pl.BlockSpec((crp, C), lambda n: (0, 0)),
            pl.BlockSpec((1, C), lambda n: (0, 0)),
        ],
        out_specs=pl.BlockSpec((1, HW, C), lambda n: (n, 0, 0)),
        out_shape=jax.ShapeDtypeStruct((N, HW, C), jnp.float32),
        compiler_params=pltpu.CompilerParams(
            dimension_semantics=("parallel",)),
    )(x2, w1p, b1p, w2p, b2p)
    return out.reshape(N, H, W, C)


# ----------------------------------------------------------------------------
# Kernel 4: 3x3 conv (+ folded BN + GELU) as an in-kernel 9-tap accumulation
# ----------------------------------------------------------------------------
def _conv3x3_kernel(H, W, act_fn, x_ref, w_ref, s_ref, b_ref, o_ref):
    # x_ref: ((H+2)*(W+2)+8, Cin) f32 = zero-padded image, row-flattened.
    # For tap (dy,dx) the rows needed for output row r=y*(W+2)+x are exactly
    # the contiguous slab x_ref[dy*(W+2)+dx : ... + H*(W+2)], so each tap is
    # one slab load + one MXU matmul accumulated into the output block.
    Wp = W + 2
    R = H * Wp
    for t in range(9):
        dy, dx = divmod(t, 3)
        off = dy * Wp + dx
        tap = x_ref[pl.ds(off, R), :].astype(jnp.bfloat16)
        c = jnp.dot(tap, w_ref[t], preferred_element_type=jnp.float32)
        if t == 0:
            o_ref[...] = c
        else:
            o_ref[...] += c
    o_ref[...] = act_fn(o_ref[...] * s_ref[...] + b_ref[...])


_BN_EPS = 1e-5


def bn_fold(C, conv_bias=None):
    # BatchNorm2d in eval mode with default running stats (mean=0, var=1,
    # gamma=1, beta=0) folded into a per-channel scale/shift.
    scale = jnp.full((C,), 1.0 / jnp.sqrt(1.0 + _BN_EPS), jnp.float32)
    if conv_bias is None:
        shift = jnp.zeros((C,), jnp.float32)
    else:
        shift = conv_bias * scale
    return scale, shift


def conv3x3_bn_gelu(x, w):
    """x: (N,H,W,Cin) NHWC, w: (3,3,Cin,Cout). Conv(bias=False)+BN+GELU."""
    N, H, W, Cin = x.shape
    Cout = w.shape[-1]
    Wp = W + 2
    w_taps = w.reshape(9, Cin, Cout).astype(jnp.bfloat16)
    scale, shift = bn_fold(Cout)
    sp = scale.reshape(1, Cout)
    bp = shift.reshape(1, Cout)
    kern = functools.partial(_conv3x3_kernel, H, W, ACTS["gelu"])
    outs = []
    for n in range(N):                      # N == 1 for every conv in desam
        xp = jnp.pad(x[n], ((1, 1), (1, 1), (0, 0)))
        xf = xp.reshape((H + 2) * Wp, Cin)
        # +8 zero rows so the (dy=2,dx=2) tap's slab read stays in bounds.
        xf = jnp.pad(xf, ((0, 8), (0, 0)))
        out = pl.pallas_call(
            kern,
            out_shape=jax.ShapeDtypeStruct((H * Wp, Cout), jnp.float32),
        )(xf, w_taps, sp, bp)
        outs.append(out.reshape(H, Wp, Cout)[:, :W, :])
    return jnp.stack(outs, 0)


def deconv2x2_bn_gelu(x, w, b):
    """ConvTranspose2d(k=2,s=2)+BN+GELU.  x NHWC, w: (Cin,2,2,Cout), b: (Cout,)."""
    N, H, W, Cin = x.shape
    Cout = w.shape[-1]
    w2 = w.reshape(Cin, 4 * Cout)                    # cols ordered (ki,kj,cout)
    scale_c, shift_c = bn_fold(Cout, conv_bias=b)
    scale = jnp.tile(scale_c, 4)
    shift = jnp.tile(shift_c, 4)
    y = matmul_fused(x.reshape(N * H * W, Cin), w2, scale, shift, act="gelu")
    y = y.reshape(N, H, W, 2, 2, Cout).transpose(0, 1, 3, 2, 4, 5)
    return y.reshape(N, 2 * H, 2 * W, Cout)          # depth-to-space


def cross_conv_fwd(x, p):
    # CrossConv with shortcut=False (as used in desam): cv2(cv1(x))
    x = conv3x3_bn_gelu(x, p["cv1"]["w"])
    x = conv3x3_bn_gelu(x, p["cv2"]["w"])
    return x


def conv_se_fwd(x, p):
    x = cross_conv_fwd(x, p["cc"])
    x = senet_fwd(x, p["se"])
    return x


def mlp_fwd(x, layers):
    n = len(layers)
    for i, (w, b) in enumerate(layers):
        x = matmul_fused(x, w, shift=b, act="relu" if i < n - 1 else "none")
    return x


# ----------------------------------------------------------------------------
# Transformer stand-in (the PyTorch module receives `transformer` by injection;
# here: token->image cross-attention + token MLP + image->token cross-attention,
# batch folded into matmul rows, shared-input projections fused).
# ----------------------------------------------------------------------------
def transformer_fwd(src_nchw, pos_nchw, tokens, p):
    B, C, H, W = src_nchw.shape
    HW = H * W
    Nt = tokens.shape[1]
    keys = src_nchw.transpose(0, 2, 3, 1).reshape(B * HW, C)
    pe = pos_nchw.transpose(0, 2, 3, 1).reshape(B * HW, C)
    t = tokens.reshape(B * Nt, C)
    kpe = keys + pe

    # token -> image cross attention (wk / wq2 share the keys+pe input: fused)
    q = matmul_fused(t, p["wq"], shift=p["bq"])
    kq2 = matmul_fused(kpe,
                       jnp.concatenate([p["wk"], p["wq2"]], axis=1),
                       shift=jnp.concatenate([p["bk"], p["bq2"]], axis=0))
    k1, q2 = kq2[:, :C], kq2[:, C:]
    v1 = matmul_fused(keys, p["wv"], shift=p["bv"])
    a1 = attention(q.reshape(B, Nt, C), k1.reshape(B, HW, C),
                   v1.reshape(B, HW, C)).reshape(B * Nt, C)
    t = t + matmul_fused(a1, p["wo"], shift=p["bo"])

    # token MLP
    t = t + matmul_fused(
        matmul_fused(t, p["w1"], shift=p["b1"], act="relu"),
        p["w2"], shift=p["b2"])

    # image -> token cross attention (wk2 / wv2 share the token input: fused)
    kv2 = matmul_fused(t,
                       jnp.concatenate([p["wk2"], p["wv2"]], axis=1),
                       shift=jnp.concatenate([p["bk2"], p["bv2"]], axis=0))
    k2, v2 = kv2[:, :C], kv2[:, C:]
    a2 = attention(q2.reshape(B, HW, C), k2.reshape(B, Nt, C),
                   v2.reshape(B, Nt, C)).reshape(B * HW, C)
    keys = keys + matmul_fused(a2, p["wo2"], shift=p["bo2"])
    return t.reshape(B, Nt, C), keys.reshape(B, HW, C)


# ----------------------------------------------------------------------------
# desam
# ----------------------------------------------------------------------------
def desam_fwd(image_embed_nhwc, mask_embeds_nhwc, p):
    de9 = conv_se_fwd(mask_embeds_nhwc[0], p["de1"])
    de6 = deconv2x2_bn_gelu(mask_embeds_nhwc[1], p["up2"]["w"], p["up2"]["b"])
    de6 = conv_se_fwd(de6, p["de2"])
    de3 = deconv2x2_bn_gelu(mask_embeds_nhwc[2], p["up3"]["w"], p["up3"]["b"])
    de3 = conv_se_fwd(de3, p["de3"])
    de3 = deconv2x2_bn_gelu(de3, p["up33"]["w"], p["up33"]["b"])
    de3 = conv_se_fwd(de3, p["de33"])

    fu1 = jnp.concatenate([image_embed_nhwc, de9], axis=-1)
    fu1 = deconv2x2_bn_gelu(fu1, p["fu1_de"]["w"], p["fu1_de"]["b"])
    fu1 = conv_se_fwd(fu1, p["fu1_cs"])

    fu2 = jnp.concatenate([fu1, de6], axis=-1)
    fu2 = deconv2x2_bn_gelu(fu2, p["fu2_de"]["w"], p["fu2_de"]["b"])
    fu2 = conv_se_fwd(fu2, p["fu2_cs"])

    fu3 = jnp.concatenate([fu2, de3], axis=-1)
    fu3 = conv_se_fwd(fu3, p["fu3_cs"])
    return fu3                                       # (N, 4H, 4W, 32) NHWC


# ----------------------------------------------------------------------------
# MaskDecoder forward
# ----------------------------------------------------------------------------
NUM_MASK_TOKENS = 2
TRANSFORMER_DIM = 256


def mask_decoder_forward(params, image_embeddings_list, image_pe,
                         sparse_prompt_embeddings, dense_prompt_embeddings,
                         multimask_output=False):
    de_in = image_embeddings_list[1:]                # list of (1,H,W,768) NHWC
    image_embeddings = image_embeddings_list[0]      # (1, 256, H, W) NCHW

    B = sparse_prompt_embeddings.shape[0]
    D = TRANSFORMER_DIM
    output_tokens = jnp.concatenate(
        [params["iou_token"], params["mask_tokens"]], axis=0)     # (3, D)
    output_tokens = jnp.broadcast_to(output_tokens[None], (B, 3, D))
    tokens = jnp.concatenate([output_tokens, sparse_prompt_embeddings], axis=1)

    if dense_prompt_embeddings.shape[0] == 1:
        src = jnp.repeat(image_embeddings, B, axis=0)
    else:
        src = image_embeddings
    src = src + dense_prompt_embeddings
    pos_src = jnp.repeat(image_pe, B, axis=0)
    b, c, h, w = src.shape

    hs, src2 = transformer_fwd(src, pos_src, tokens, params["transformer"])
    iou_token_out = hs[:, 0, :]
    mask_tokens_out = hs[:, 1:1 + NUM_MASK_TOKENS, :]

    # (B, HW, C) -> NHWC feature map (equivalent to PyTorch transpose/view NCHW)
    src_nhwc = src2.reshape(b, h, w, c)
    upscaled = desam_fwd(src_nhwc, list(de_in), params["desam"])

    hyper = []
    for i in range(NUM_MASK_TOKENS):
        hyper.append(mlp_fwd(mask_tokens_out[:, i, :], params["hyper_mlps"][i]))
    hyper_in = jnp.stack(hyper, axis=1)              # (B, 2, D//8)

    Bp, H4, W4, Cup = upscaled.shape
    masks_list = []
    for n in range(Bp):                              # Bp == 1 in this model
        flat = upscaled[n].reshape(H4 * W4, Cup).T   # (Cup, H4*W4)
        m = matmul_fused(hyper_in[n], flat)          # (2, H4*W4)
        masks_list.append(m.reshape(NUM_MASK_TOKENS, H4, W4))
    masks = jnp.stack(masks_list, 0)                 # (B, 2, 4H, 4W)

    iou_pred = mlp_fwd(iou_token_out, params["iou_head"])   # (B, 4)
    return masks, iou_pred


# ----------------------------------------------------------------------------
# Deterministic parameter initialization
# ----------------------------------------------------------------------------
class ParamGen:
    def __init__(self, key):
        self.key = key

    def take(self, shape, scale=0.02):
        self.key, sub = jax.random.split(self.key)
        return jax.random.normal(sub, shape, jnp.float32) * scale


def init_params(key):
    pg = ParamGen(key)
    D = TRANSFORMER_DIM

    def lin(din, dout):
        return (pg.take((din, dout)), pg.take((dout,)))

    params = {}
    params["iou_token"] = pg.take((1, D))
    params["mask_tokens"] = pg.take((NUM_MASK_TOKENS, D))

    tr = {}
    for name in ["q", "k", "v", "o", "q2", "k2", "v2", "o2"]:
        w, b = lin(D, D)
        tr["w" + name] = w
        tr["b" + name] = b
    tr["w1"], tr["b1"] = lin(D, 2 * D)
    tr["w2"], tr["b2"] = lin(2 * D, D)
    params["transformer"] = tr

    params["hyper_mlps"] = [[lin(D, D), lin(D, D), lin(D, D // 8)]
                            for _ in range(NUM_MASK_TOKENS)]
    params["iou_head"] = [lin(D, 256), lin(256, 256), lin(256, 4)]

    def conv_p(cin, cout):
        return {"w": pg.take((3, 3, cin, cout))}

    def cross_conv_p(cin, cout):
        return {"cv1": conv_p(cin, cout), "cv2": conv_p(cout, cout)}

    def senet_p(c, r=16):
        cr = max(c // r, 1)
        return {"fc1_w": pg.take((c, cr)), "fc1_b": pg.take((cr,)),
                "fc2_w": pg.take((cr, c)), "fc2_b": pg.take((c,))}

    def conv_se_p(cin, cout):
        return {"cc": cross_conv_p(cin, cout), "se": senet_p(cout)}

    def deconv_p(cin, cout):
        return {"w": pg.take((cin, 2, 2, cout)), "b": pg.take((cout,))}

    params["desam"] = {
        "de1": conv_se_p(768, 256),
        "de2": conv_se_p(256, 128),
        "de3": conv_se_p(256, 128),
        "de33": conv_se_p(64, 64),
        "up2": deconv_p(768, 256),
        "up3": deconv_p(768, 256),
        "up33": deconv_p(128, 64),
        "fu1_de": deconv_p(512, 128),
        "fu1_cs": conv_se_p(128, 128),
        "fu2_de": deconv_p(256, 64),
        "fu2_cs": conv_se_p(64, 64),
        "fu3_cs": conv_se_p(128, 32),
    }
    return params


# ----------------------------------------------------------------------------
# Main
# ----------------------------------------------------------------------------
if __name__ == "__main__":
    params = init_params(jax.random.PRNGKey(42))

    key = jax.random.PRNGKey(0)
    kk = jax.random.split(key, 8)
    B, D, H, W = 1, TRANSFORMER_DIM, 8, 8

    img_embed = jax.random.normal(kk[0], (1, D, H, W), jnp.float32)        # NCHW
    m0 = jax.random.normal(kk[1], (1, H, W, 768), jnp.float32) * 0.5        # NHWC
    m1 = jax.random.normal(kk[2], (1, H, W, 768), jnp.float32) * 0.5
    m2 = jax.random.normal(kk[3], (1, H, W, 768), jnp.float32) * 0.5
    image_pe = jax.random.normal(kk[4], (1, D, H, W), jnp.float32)
    sparse = jax.random.normal(kk[5], (B, 2, D), jnp.float32)
    dense = jax.random.normal(kk[6], (1, D, H, W), jnp.float32)

    masks, iou_pred = mask_decoder_forward(
        params, [img_embed, m0, m1, m2], image_pe, sparse, dense,
        multimask_output=False)

    jax.block_until_ready((masks, iou_pred))
    assert masks.shape == (B, NUM_MASK_TOKENS, 4 * H, 4 * W), masks.shape
    assert iou_pred.shape == (B, 4), iou_pred.shape
    assert bool(jnp.all(jnp.isfinite(masks))) and bool(jnp.all(jnp.isfinite(iou_pred)))
    print("KERNEL_OK")
</pallas_src>

<mosaic_0001>
module attributes {stable_mosaic.version = 11 : i64} {
  func.func @_mm_kernel(%arg0: i32, %arg1: i32, %arg2: i32, %arg3: memref<8x256xbf16, #tpu.memory_space<vmem>>, %arg4: memref<256x256xbf16, #tpu.memory_space<vmem>>, %arg5: memref<1x256xf32, #tpu.memory_space<vmem>>, %arg6: memref<1x256xf32, #tpu.memory_space<vmem>>, %arg7: memref<8x256xf32, #tpu.memory_space<vmem>>) attributes {dimension_semantics = [#tpu.dimension_semantics<parallel>, #tpu.dimension_semantics<parallel>, #tpu.dimension_semantics<arbitrary>], iteration_bounds = array<i64: 1, 1, 1>, scalar_prefetch = 0 : i64, scratch_operands = 0 : i64, tpu.core_type = #tpu.core_type<tc>, window_params = [{transform_indices = @transform_0, window_bounds = array<i64: 8, 256>}, {transform_indices = @transform_1, window_bounds = array<i64: 256, 256>}, {transform_indices = @transform_2, window_bounds = array<i64: 1, 256>}, {transform_indices = @transform_3, window_bounds = array<i64: 1, 256>}, {transform_indices = @transform_4, window_bounds = array<i64: 8, 256>}]} {
    %c0_i32 = arith.constant 0 : i32
    %0 = arith.cmpi eq, %arg2, %c0_i32 : i32
    %1 = arith.extui %0 : i1 to i32
    %c0_i32_0 = arith.constant 0 : i32
    %2 = arith.cmpi ne, %1, %c0_i32_0 : i32
    scf.if %2 {
      %cst_10 = arith.constant 0.000000e+00 : f32
      %12 = vector.broadcast %cst_10 : f32 to vector<8x256xf32>
      %c0_11 = arith.constant 0 : index
      %c0_12 = arith.constant 0 : index
      %13 = vector.load %arg7[%c0_11, %c0_12] : memref<8x256xf32, #tpu.memory_space<vmem>>, vector<8x256xf32>
      tpu.vector_store %arg7[%c0_11, %c0_12], %12 {strides = array<i32>} : memref<8x256xf32, #tpu.memory_space<vmem>>, vector<8x256xf32>,
    } else {
    }
    %c0 = arith.constant 0 : index
    %c0_1 = arith.constant 0 : index
    %3 = vector.load %arg7[%c0, %c0_1] : memref<8x256xf32, #tpu.memory_space<vmem>>, vector<8x256xf32>
    %c0_2 = arith.constant 0 : index
    %c0_3 = arith.constant 0 : index
    %4 = vector.load %arg3[%c0_2, %c0_3] : memref<8x256xbf16, #tpu.memory_space<vmem>>, vector<8x256xbf16>
    %c0_4 = arith.constant 0 : index
    %c0_5 = arith.constant 0 : index
    %5 = vector.load %arg4[%c0_4, %c0_5] : memref<256x256xbf16, #tpu.memory_space<vmem>>, vector<256x256xbf16>
    %cst = arith.constant dense<0.000000e+00> : vector<8x256xf32>
    %6 = tpu.matmul %4, %5, %cst {dimension_numbers = #tpu.dot_dimension_numbers<[1], [0], [0], [1], [0, 0, 1, 1], [], []>} : vector<8x256xbf16>, vector<256x256xbf16>, vector<8x256xf32> -> vector<8x256xf32>
    %7 = arith.addf %3, %6 : vector<8x256xf32>
    %c0_6 = arith.constant 0 : index
    %c0_7 = arith.constant 0 : index
    %8 = vector.load %arg7[%c0_6, %c0_7] : memref<8x256xf32, #tpu.memory_space<vmem>>, vector<8x256xf32>
    tpu.vector_store %arg7[%c0_6, %c0_7], %7 {strides = array<i32>} : memref<8x256xf32, #tpu.memory_space<vmem>>, vector<8x256xf32>,
    %c0_i32_8 = arith.constant 0 : i32
    %9 = arith.cmpi eq, %arg2, %c0_i32_8 : i32
    %10 = arith.extui %9 : i1 to i32
    %c0_i32_9 = arith.constant 0 : i32
    %11 = arith.cmpi ne, %10, %c0_i32_9 : i32
    scf.if %11 {
      %c0_10 = arith.constant 0 : index
      %c0_11 = arith.constant 0 : index
      %12 = vector.load %arg7[%c0_10, %c0_11] : memref<8x256xf32, #tpu.memory_space<vmem>>, vector<8x256xf32>
      %c0_12 = arith.constant 0 : index
      %c0_13 = arith.constant 0 : index
      %13 = vector.load %arg5[%c0_12, %c0_13] : memref<1x256xf32, #tpu.memory_space<vmem>>, vector<1x256xf32>
      %14 = vector.broadcast %13 : vector<1x256xf32> to vector<8x256xf32>
      %15 = arith.mulf %12, %14 : vector<8x256xf32>
      %c0_14 = arith.constant 0 : index
      %c0_15 = arith.constant 0 : index
      %16 = vector.load %arg6[%c0_14, %c0_15] : memref<1x256xf32, #tpu.memory_space<vmem>>, vector<1x256xf32>
      %17 = vector.broadcast %16 : vector<1x256xf32> to vector<8x256xf32>
      %18 = arith.addf %15, %17 : vector<8x256xf32>
      %c0_16 = arith.constant 0 : index
      %c0_17 = arith.constant 0 : index
      %19 = vector.load %arg7[%c0_16, %c0_17] : memref<8x256xf32, #tpu.memory_space<vmem>>, vector<8x256xf32>
      tpu.vector_store %arg7[%c0_16, %c0_17], %18 {strides = array<i32>} : memref<8x256xf32, #tpu.memory_space<vmem>>, vector<8x256xf32>,
    } else {
    }
    return
  }
  func.func @transform_0(%arg0: i32, %arg1: i32, %arg2: i32) -> (i32, i32) {
    %c0_i32 = arith.constant 0 : i32
    return %arg0, %arg2 : i32, i32
  }
  func.func @transform_1(%arg0: i32, %arg1: i32, %arg2: i32) -> (i32, i32) {
    %c0_i32 = arith.constant 0 : i32
    return %arg2, %arg1 : i32, i32
  }
  func.func @transform_2(%arg0: i32, %arg1: i32, %arg2: i32) -> (i32, i32) {
    %c0_i32 = arith.constant 0 : i32
    %c0_i32_0 = arith.constant 0 : i32
    return %c0_i32, %arg1 : i32, i32
  }
  func.func @transform_3(%arg0: i32, %arg1: i32, %arg2: i32) -> (i32, i32) {
    %c0_i32 = arith.constant 0 : i32
    %c0_i32_0 = arith.constant 0 : i32
    return %c0_i32, %arg1 : i32, i32
  }
  func.func @transform_4(%arg0: i32, %arg1: i32, %arg2: i32) -> (i32, i32) {
    %c0_i32 = arith.constant 0 : i32
    return %arg0, %arg1 : i32, i32
  }
}

</mosaic_0001>

<llo_original>
// kernel: tpu_custom_call.1
$region0: #{tpu_custom_call.1}
  #allocation0 [shape = 'u32[]', space=smem, size = 0x4, offset = 0x4, fixed_abs, tag = 'smem constant byte address 0x4 - core index']
  #allocation1 [shape = 'u32[144,128]{1,0:T(1,128)}', space=vmem, size = 0x12000, scoped, tag = 'internal scratch']
  %s0 = inlined_call_operand.hbm [shape: bf16[8,256], index: 0, kind: input, shape index: {}]
  %s1 = inlined_call_operand.hbm [shape: bf16[256,256], index: 1, kind: input, shape index: {}]
  %s2 = inlined_call_operand.vmem [shape: f32[1,256], index: 2, kind: input, shape index: {}]
  %s3 = inlined_call_operand.vmem [shape: f32[1,256], index: 3, kind: input, shape index: {}]
  %s4 = inlined_call_operand.hbm [shape: f32[8,256], index: 4, kind: output, shape index: {}]
  %s5 = sld [smem:[#allocation0]]
  $region42: #{tpu_custom_call.1} parent=0
    _
  %s7 = ssub.s32 1, %s5
  %s8 = scalar_select 0, %s7, %s5
  $region1: #{tpu_custom_call.1} parent=0
    #allocation2 [shape = 'u8[4096]{0}', space=vmem, size = 0x1000, scoped, tag = 'input window, operand 0, single buffered']
    #allocation3 [shape = 's32[1]{0}', space=sflag, size = 0x4, scoped, tag = 'scoped memory for tpu_custom_call.1']
    #allocation4 [shape = 's32[1]{0}', space=sflag, size = 0x4, scoped, tag = 'scoped memory for tpu_custom_call.1']
    #allocation5 [shape = 'u8[131072]{0}', space=vmem, size = 0x20000, scoped, tag = 'input window, operand 1, single buffered']
    #allocation6 [shape = 's32[1]{0}', space=sflag, size = 0x4, scoped, tag = 'scoped memory for tpu_custom_call.1']
    #allocation7 [shape = 'u8[8192]{0}', space=vmem, size = 0x2000, scoped, tag = 'output window, operand 0, single buffered']
    %9 = vsyncpa [#allocation3], 0
    %10 = vsyncpa [#allocation6], 0
    %11 = vsyncpa [#allocation4], 0
    // Predicated region
    $region2: #{tpu_custom_call.1} parent=1 // pred_check
      _
    $region3: #{tpu_custom_call.1} parent=1 // pred_check_branch
      %13 = sbr.rel (0) target = $region5
    $region4: #{tpu_custom_call.1} parent=1 // pred_region
      %s15 = ssub.s32 128, 128
      %16 = vsyncadd [#allocation3], %s15
      %s18 = sshll.u32 [#allocation2], 4
      %s19 = int_to_ptr.vmem [resolvable:$true] %s18
      %21 = dma.hbm_to_vmem [thread:$0]  %s0, 128, %s19, [#allocation3]
    $region5: #{tpu_custom_call.1} parent=1 // pred_fallthru
      _
    // Predicated region
    $region6: #{tpu_custom_call.1} parent=1 // pred_check
      _
    $region7: #{tpu_custom_call.1} parent=1 // pred_check_branch
      %23 = sbr.rel (0) target = $region9
    $region8: #{tpu_custom_call.1} parent=1 // pred_region
      %s25 = ssub.s32 4096, 4096
      %26 = vsyncadd [#allocation6], %s25
      %s27 = sshll.u32 [#allocation5], 4
      %s28 = int_to_ptr.vmem [resolvable:$true] %s27
      %33 = dma.hbm_to_vmem [thread:$0]  %s1, 4096, %s28, [#allocation6], 128, 128, 8
    $region9: #{tpu_custom_call.1} parent=1 // pred_fallthru
      _
    // Predicated region
    $region10: #{tpu_custom_call.1} parent=1 // pred_check
      _
    $region11: #{tpu_custom_call.1} parent=1 // pred_check_branch
      %35 = sbr.rel (0) target = $region13
    $region12: #{tpu_custom_call.1} parent=1 // pred_region
      _
    $region13: #{tpu_custom_call.1} parent=1 // pred_fallthru
      _
    // Predicated region
    $region14: #{tpu_custom_call.1} parent=1 // pred_check
      _
    $region15: #{tpu_custom_call.1} parent=1 // pred_check_branch
      %37 = sbr.rel (0) target = $region17
    $region16: #{tpu_custom_call.1} parent=1 // pred_region
      _
    $region17: #{tpu_custom_call.1} parent=1 // pred_fallthru
      _
    // Predicated region
    $region18: #{tpu_custom_call.1} parent=1 // pred_check
      _
    $region19: #{tpu_custom_call.1} parent=1 // pred_check_branch
      %39 = sbr.rel (0) target = $region21
    $region20: #{tpu_custom_call.1} parent=1 // pred_region
      %40 = dma.done [#allocation3], 128
    $region21: #{tpu_custom_call.1} parent=1 // pred_fallthru
      _
    // Predicated region
    $region22: #{tpu_custom_call.1} parent=1 // pred_check
      _
    $region23: #{tpu_custom_call.1} parent=1 // pred_check_branch
      %42 = sbr.rel (0) target = $region25
    $region24: #{tpu_custom_call.1} parent=1 // pred_region
      %43 = dma.done [#allocation6], 4096
    $region25: #{tpu_custom_call.1} parent=1 // pred_fallthru
      _
    %p44 = scmp.eq.s32.totalorder 0, 0
    // Predicated region
    $region26: #{tpu_custom_call.1} parent=1 // pred_check
      %p45 = pneg %p44
    $region27: #{tpu_custom_call.1} parent=1 // pred_check_branch
      %47 = sbr.rel (%p45) target = $region29
    $region28: #{tpu_custom_call.1} parent=1 // pred_region
      %48 = vst [vmem:[#allocation7] sm:$0xff] 0.0
      %49 = vst [vmem:[#allocation7 + $0x8] sm:$0xff] 0.0
    $region29: #{tpu_custom_call.1} parent=1 // pred_fallthru
      _
    %v50 = vld [vmem:[#allocation7] sm:$0xff]
    %v51 = vld [vmem:[#allocation7 + $0x8] sm:$0xff]
    %v52 = vld [vmem:[#allocation2] sm:$0xff]
    %v53 = vld [vmem:[#allocation5] sm:$0xff]
    %v54 = vld [vmem:[#allocation5 + $0x8] sm:$0xff]
    %v55 = vld [vmem:[#allocation5 + $0x10] sm:$0xff]
    %v56 = vld [vmem:[#allocation5 + $0x18] sm:$0xff]
    %v57 = vld [vmem:[#allocation5 + $0x20] sm:$0xff]
    %v58 = vld [vmem:[#allocation5 + $0x28] sm:$0xff]
    %v59 = vld [vmem:[#allocation5 + $0x30] sm:$0xff]
    %v60 = vld [vmem:[#allocation5 + $0x38] sm:$0xff]
    %v61 = vld [vmem:[#allocation5 + $0x40] sm:$0xff]
    %v62 = vld [vmem:[#allocation5 + $0x48] sm:$0xff]
    %v63 = vld [vmem:[#allocation5 + $0x50] sm:$0xff]
    %v64 = vld [vmem:[#allocation5 + $0x58] sm:$0xff]
    %v65 = vld [vmem:[#allocation5 + $0x60] sm:$0xff]
    %v66 = vld [vmem:[#allocation5 + $0x68] sm:$0xff]
    %v67 = vld [vmem:[#allocation5 + $0x70] sm:$0xff]
    %v68 = vld [vmem:[#allocation5 + $0x78] sm:$0xff]
    %v69 = vld [vmem:[#allocation5 + $0x80] sm:$0xff]
    %v70 = vld [vmem:[#allocation5 + $0x88] sm:$0xff]
    %v71 = vld [vmem:[#allocation5 + $0x90] sm:$0xff]
    %v72 = vld [vmem:[#allocation5 + $0x98] sm:$0xff]
    %v73 = vld [vmem:[#allocation5 + $0xa0] sm:$0xff]
    %v74 = vld [vmem:[#allocation5 + $0xa8] sm:$0xff]
    %v75 = vld [vmem:[#allocation5 + $0xb0] sm:$0xff]
    %v76 = vld [vmem:[#allocation5 + $0xb8] sm:$0xff]
    %v77 = vld [vmem:[#allocation5 + $0xc0] sm:$0xff]
    %v78 = vld [vmem:[#allocation5 + $0xc8] sm:$0xff]
    %v79 = vld [vmem:[#allocation5 + $0xd0] sm:$0xff]
    %v80 = vld [vmem:[#allocation5 + $0xd8] sm:$0xff]
    %v81 = vld [vmem:[#allocation5 + $0xe0] sm:$0xff]
    %v82 = vld [vmem:[#allocation5 + $0xe8] sm:$0xff]
    %v83 = vld [vmem:[#allocation5 + $0xf0] sm:$0xff]
    %v84 = vld [vmem:[#allocation5 + $0xf8] sm:$0xff]
    %v86 = vunpack.c.l.b16 %v52
    %v87 = vunpack.c.h.b16 %v52
    %v88 = vpack.c.b16 %v86, %v86
    %v89 = vpack.c.b16 %v87, %v87
    %v124 = vunpack.c.l.b16 %v53
    %v125 = vunpack.c.h.b16 %v53
    %v126 = vunpack.c.l.b16 %v54
    %v127 = vunpack.c.h.b16 %v54
    %v128 = vunpack.c.l.b16 %v55
    %v129 = vunpack.c.h.b16 %v55
    %v130 = vunpack.c.l.b16 %v56
    %v131 = vunpack.c.h.b16 %v56
    %v132 = vunpack.c.l.b16 %v57
    %v133 = vunpack.c.h.b16 %v57
    %v134 = vunpack.c.l.b16 %v58
    %v135 = vunpack.c.h.b16 %v58
    %v136 = vunpack.c.l.b16 %v59
    %v137 = vunpack.c.h.b16 %v59
    %v138 = vunpack.c.l.b16 %v60
    %v139 = vunpack.c.h.b16 %v60
    %v140 = vunpack.c.l.b16 %v61
    %v141 = vunpack.c.h.b16 %v61
    %v142 = vunpack.c.l.b16 %v62
    %v143 = vunpack.c.h.b16 %v62
    %v144 = vunpack.c.l.b16 %v63
    %v145 = vunpack.c.h.b16 %v63
    %v146 = vunpack.c.l.b16 %v64
    %v147 = vunpack.c.h.b16 %v64
    %v148 = vunpack.c.l.b16 %v65
    %v149 = vunpack.c.h.b16 %v65
    %v150 = vunpack.c.l.b16 %v66
    %v151 = vunpack.c.h.b16 %v66
    %v152 = vunpack.c.l.b16 %v67
    %v153 = vunpack.c.h.b16 %v67
    %v154 = vunpack.c.l.b16 %v68
    %v155 = vunpack.c.h.b16 %v68
    %v156 = vunpack.c.l.b16 %v69
    %v157 = vunpack.c.h.b16 %v69
    %v158 = vunpack.c.l.b16 %v70
    %v159 = vunpack.c.h.b16 %v70
    %v160 = vunpack.c.l.b16 %v71
    %v161 = vunpack.c.h.b16 %v71
    %v162 = vunpack.c.l.b16 %v72
    %v163 = vunpack.c.h.b16 %v72
    %v164 = vunpack.c.l.b16 %v73
    %v165 = vunpack.c.h.b16 %v73
    %v166 = vunpack.c.l.b16 %v74
    %v167 = vunpack.c.h.b16 %v74
    %v168 = vunpack.c.l.b16 %v75
    %v169 = vunpack.c.h.b16 %v75
    %v170 = vunpack.c.l.b16 %v76
    %v171 = vunpack.c.h.b16 %v76
    %v172 = vunpack.c.l.b16 %v77
    %v173 = vunpack.c.h.b16 %v77
    %v174 = vunpack.c.l.b16 %v78
    %v175 = vunpack.c.h.b16 %v78
    %v176 = vunpack.c.l.b16 %v79
    %v177 = vunpack.c.h.b16 %v79
    %v178 = vunpack.c.l.b16 %v80
    %v179 = vunpack.c.h.b16 %v80
    %v180 = vunpack.c.l.b16 %v81
    %v181 = vunpack.c.h.b16 %v81
    %v182 = vunpack.c.l.b16 %v82
    %v183 = vunpack.c.h.b16 %v82
    %v184 = vunpack.c.l.b16 %v83
    %v185 = vunpack.c.h.b16 %v83
    %v186 = vunpack.c.l.b16 %v84
    %v187 = vunpack.c.h.b16 %v84
    %v188 = vpack.c.b16 %v126, %v124
    %v189 = vpack.c.b16 %v127, %v125
    %v190 = vpack.c.b16 %v130, %v128
    %v191 = vpack.c.b16 %v131, %v129
    %v192 = vpack.c.b16 %v134, %v132
    %v193 = vpack.c.b16 %v135, %v133
    %v194 = vpack.c.b16 %v138, %v136
    %v195 = vpack.c.b16 %v139, %v137
    %v196 = vpack.c.b16 %v142, %v140
    %v197 = vpack.c.b16 %v143, %v141
    %v198 = vpack.c.b16 %v146, %v144
    %v199 = vpack.c.b16 %v147, %v145
    %v200 = vpack.c.b16 %v150, %v148
    %v201 = vpack.c.b16 %v151, %v149
    %v202 = vpack.c.b16 %v154, %v152
    %v203 = vpack.c.b16 %v155, %v153
    %v204 = vpack.c.b16 %v158, %v156
    %v205 = vpack.c.b16 %v159, %v157
    %v206 = vpack.c.b16 %v162, %v160
    %v207 = vpack.c.b16 %v163, %v161
    %v208 = vpack.c.b16 %v166, %v164
    %v209 = vpack.c.b16 %v167, %v165
    %v210 = vpack.c.b16 %v170, %v168
    %v211 = vpack.c.b16 %v171, %v169
    %v212 = vpack.c.b16 %v174, %v172
    %v213 = vpack.c.b16 %v175, %v173
    %v214 = vpack.c.b16 %v178, %v176
    %v215 = vpack.c.b16 %v179, %v177
    %v216 = vpack.c.b16 %v182, %v180
    %v217 = vpack.c.b16 %v183, %v181
    %v218 = vpack.c.b16 %v186, %v184
    %v219 = vpack.c.b16 %v187, %v185
    %252 = vmatprep.subr.bf16.mxu0 %v203
    %253 = vmatpush1.bf16.msra.mxu0 %v202
    %254 = vmatprep.subr.bf16.mxu0 %v201
    %255 = vmatpush1.bf16.msra.mxu0 %v200
    %256 = vmatprep.subr.bf16.mxu0 %v199
    %257 = vmatpush1.bf16.msra.mxu0 %v198
    %258 = vmatprep.subr.bf16.mxu0 %v197
    %259 = vmatpush1.bf16.msra.mxu0 %v196
    %260 = vmatprep.subr.bf16.mxu0 %v195
    %261 = vmatpush1.bf16.msra.mxu0 %v194
    %262 = vmatprep.subr.bf16.mxu0 %v193
    %263 = vmatpush1.bf16.msra.mxu0 %v192
    %264 = vmatprep.subr.bf16.mxu0 %v191
    %265 = vmatpush1.bf16.msra.mxu0 %v190
    %266 = vmatprep.subr.bf16.mxu0 %v189
    %267 = vmatpush1.bf16.msra.mxu0 %v188
    %268 = vmatprep.subr.bf16.mxu0 %v219
    %269 = vmatpush2.bf16.msra.mxu0 %v218
    %270 = vmatprep.subr.bf16.mxu0 %v217
    %271 = vmatpush2.bf16.msra.mxu0 %v216
    %272 = vmatprep.subr.bf16.mxu0 %v215
    %273 = vmatpush2.bf16.msra.mxu0 %v214
    %274 = vmatprep.subr.bf16.mxu0 %v213
    %275 = vmatpush2.bf16.msra.mxu0 %v212
    %276 = vmatprep.subr.bf16.mxu0 %v211
    %277 = vmatpush2.bf16.msra.mxu0 %v210
    %278 = vmatprep.subr.bf16.mxu0 %v209
    %279 = vmatpush2.bf16.msra.mxu0 %v208
    %280 = vmatprep.subr.bf16.mxu0 %v207
    %281 = vmatpush2.bf16.msra.mxu0 %v206
    %282 = vmatprep.subr.bf16.mxu0 %v205
    %283 = vmatpush2.bf16.msra.mxu0 %v204
    %284 = vmatprep.mubr.bf16.mxu0 %v89
    %285 = vmatmul.mubr.bf16.gmra.mxu0 %v88
    %v286 = vpop.f32.mrf.mxu0
    %v287 = vadd.f32 0.0, %v286
    %v288 = vpop.f32.mrf.mxu0
    %v289 = vadd.f32 0.0, %v288
    %v290 = vpop.f32.mrf.mxu0
    %v291 = vpop.f32.mrf.mxu0
    %292 = vdwg.mxu0
    %v293 = vadd.f32 %v50, %v287
    %v294 = vadd.f32 %v51, %v289
    %295 = vst [vmem:[#allocation7] sm:$0xff] %v293
    %296 = vst [vmem:[#allocation7 + $0x8] sm:$0xff] %v294
    // Predicated region
    $region30: #{tpu_custom_call.1} parent=1 // pred_check
      %p297 = pneg %p44
    $region31: #{tpu_custom_call.1} parent=1 // pred_check_branch
      %299 = sbr.rel (%p297) target = $region33
    $region32: #{tpu_custom_call.1} parent=1 // pred_region
      %v300 = vld [vmem:[#allocation7] sm:$0xff]
      %v301 = vld [vmem:[#allocation7 + $0x8] sm:$0xff]
      %v302 = vld [vmem:[%s2] sm:$0x3]
      %v304 = vlaneseq
      %v305 = vshrl.u32 %v304, 7
      %v306 = vsub.s32 0, %v305
      %v307 = vrot.slane %v302, %v306
      %v308 = vlaneseq
      %v309 = vshrl.u32 %v308, 7
      %v310 = vsub.s32 1, %v309
      %v311 = vrot.slane %v302, %v310
      %v314 = vmul.f32 %v300, %v307
      %v315 = vmul.f32 %v301, %v311
      %v316 = vld [vmem:[%s3] sm:$0x3]
      %v318 = vlaneseq
      %v319 = vshrl.u32 %v318, 7
      %v320 = vsub.s32 0, %v319
      %v321 = vrot.slane %v316, %v320
      %v322 = vlaneseq
      %v323 = vshrl.u32 %v322, 7
      %v324 = vsub.s32 1, %v323
      %v325 = vrot.slane %v316, %v324
      %v328 = vadd.f32 %v314, %v321
      %v329 = vadd.f32 %v315, %v325
      %330 = vst [vmem:[#allocation7] sm:$0xff] %v328
      %331 = vst [vmem:[#allocation7 + $0x8] sm:$0xff] %v329
    $region33: #{tpu_custom_call.1} parent=1 // pred_fallthru
      _
    // Predicated region
    $region34: #{tpu_custom_call.1} parent=1 // pred_check
      _
    $region35: #{tpu_custom_call.1} parent=1 // pred_check_branch
      %333 = sbr.rel (0) target = $region37
    $region36: #{tpu_custom_call.1} parent=1 // pred_region
      %s335 = ssub.s32 256, 256
      %336 = vsyncadd [#allocation4], %s335
      %s338 = sshll.u32 [#allocation7], 4
      %s339 = int_to_ptr.vmem [resolvable:$true] %s338
      %341 = dma.vmem_to_hbm [thread:$0]  %s339, 256, %s4, [#allocation4]
    $region37: #{tpu_custom_call.1} parent=1 // pred_fallthru
      _
    // Predicated region
    $region38: #{tpu_custom_call.1} parent=1 // pred_check
      _
    $region39: #{tpu_custom_call.1} parent=1 // pred_check_branch
      %343 = sbr.rel (0) target = $region41
    $region40: #{tpu_custom_call.1} parent=1 // pred_region
      %344 = dma.done [#allocation4], 256
    $region41: #{tpu_custom_call.1} parent=1 // pred_fallthru
      _
    %345 = vsyncpa [#allocation3], 1
    %346 = vsyncpa [#allocation6], 1
    %347 = vsyncpa [#allocation4], 1

</llo_original>
